<compile_context>
chip_gen: v5e
topology: v5e:2x2
jax: 0.10.0
libtpu: 0.0.40
codegen_flags: <defaults>
</compile_context>

<pallas_src>
import numpy as np
import jax
import jax.numpy as jnp
from jax.experimental import pallas as pl
from jax.experimental.pallas import tpu as pltpu


def gaussian_1d(window_size: int, sigma: float) -> np.ndarray:
    xs = np.arange(window_size, dtype=np.float64)
    g = np.exp(-((xs - window_size // 2) ** 2) / float(2 * sigma ** 2))
    return g / g.sum()


def get_gaussian_kernel2d(kernel_size, sigma) -> np.ndarray:
    kx = gaussian_1d(kernel_size[0], sigma[0])   # dim 0 of the 2-D kernel -> convolves H
    ky = gaussian_1d(kernel_size[1], sigma[1])   # dim 1 of the 2-D kernel -> convolves W
    return np.outer(kx, ky)                      # (kh, kw)


def _vmem_capacity_bytes() -> int:
    try:
        return int(pltpu.get_tpu_info().vmem_capacity_bytes)
    except Exception:
        return 64 * 2 ** 20           # assume the smallest (v7x-class) VMEM if unknown


def _choose_plane_block(n_planes: int, plane_elems: int, itemsize: int, vmem_cap: int) -> int:
    """Fixed #planes per grid step: multiple of 8, working set within a per-step budget,
    and >= 2 (ideally >= 8) grid steps so a multi-TensorCore part can shard the grid."""
    # ~4 MiB blocks on 128 MiB-VMEM parts (v5e/v6e), ~2 MiB on 64 MiB parts (v7x)
    target = 4 * 2 ** 20 if vmem_cap >= 100 * 2 ** 20 else 2 * 2 ** 20
    # per-plane bytes per step: dbl-buffered in+out plus ~6 block-sized f32 temporaries
    per_plane = plane_elems * (4 * itemsize + 6 * 4)
    blk = max(8, (target // max(per_plane, 1)) // 8 * 8)
    if n_planes <= 8:
        return n_planes                              # full-dim block (legal even if not %8)
    blk = min(blk, -(-n_planes // 8) * 8)            # no bigger than the sublane-padded N
    want_steps = 8 if n_planes >= 64 else 2          # keep both v7x TCs busy
    while blk > 8 and pl.cdiv(n_planes, blk) < want_steps:
        blk -= 8
    return blk


def _vmem_limit_bytes(n_blk: int, plane_elems: int, itemsize: int,
                      n_coef: int, vmem_cap: int) -> int:
    io = 2 * 2 * n_blk * plane_elems * itemsize      # double-buffered input + output
    coef = 2 * max(n_coef, 1) * plane_elems * 4      # coef block (count 2 bufs, conservative)
    temps = 6 * n_blk * plane_elems * 4              # in-kernel f32 temporaries
    est = int((io + coef + temps) * 1.5)             # headroom for Mosaic's own scratch
    cap = min(48 * 2 ** 20, (vmem_cap * 3) // 4)     # stay well below v7x's 64 MiB
    return int(min(cap, max(16 * 2 ** 20, est)))


def _make_blur_kernel(H, W, kh, kw, wk_h, wk_w, mul_dtype):
    HW = H * W
    pad_h, pad_w = (kh - 1) // 2, (kw - 1) // 2

    def blur_kernel(coef_ref, x_ref, o_ref):
        # x_ref / o_ref: (n_blk, H*W) flattened planes (one plane per sublane row, so the
        # roll along axis 1 never mixes planes).  coef_ref: (kw+kh-2, H*W) weight*mask rows.
        x = x_ref[...]
        xf = x.astype(jnp.float32)
        xm = xf if mul_dtype == jnp.float32 else x.astype(mul_dtype)

        # ---- horizontal pass: off-centre tap = XLU roll + coef-row mul + f32 add ----
        acc_h = xf * jnp.float32(wk_w[pad_w])        # centre tap: scalar weight, no mask
        ci = 0
        for dx in range(kw):
            if dx == pad_w:
                continue
            rolled = pltpu.roll(xm, shift=(pad_w - dx) % HW, axis=1)
            crow = coef_ref[ci:ci + 1, :].astype(mul_dtype)      # weight folded with edge mask
            acc_h = acc_h + (rolled * crow).astype(jnp.float32)
            ci += 1

        # ---- vertical pass on the f32 intermediate: rolls by whole rows ----
        acc = acc_h * jnp.float32(wk_h[pad_h])       # centre tap
        for dy in range(kh):
            if dy == pad_h:
                continue
            rolled = pltpu.roll(acc_h, shift=((pad_h - dy) * W) % HW, axis=1)
            acc = acc + rolled * coef_ref[ci:ci + 1, :]
            ci += 1

        o_ref[...] = acc.astype(o_ref.dtype)

    return blur_kernel


def gaussian_blur(x: jnp.ndarray, kernel_size=(5, 5), sigma=(1.5, 1.5)) -> jnp.ndarray:
    """Equivalent of GaussianBlur(kernel_size, sigma)(x) with x in NCHW (zero padding)."""
    assert x.ndim == 4, "expect BxCxHxW"
    B, C, H, W = x.shape
    kh, kw = int(kernel_size[0]), int(kernel_size[1])
    assert kh % 2 == 1 and kw % 2 == 1, "kernel_size must be odd"
    pad_h, pad_w = (kh - 1) // 2, (kw - 1) // 2

    wk_h = gaussian_1d(kh, float(sigma[0]))          # convolves H
    wk_w = gaussian_1d(kw, float(sigma[1]))          # convolves W

    if kh == 1 and kw == 1:                          # degenerate 1x1 "blur" (weight == 1)
        return x

    N, HW = B * C, H * W
    x2 = x.reshape(N, HW)                            # fold B,C; flatten pixels (lane-dense)

    # Per-tap coefficient rows: Gaussian weight folded with the zero-padding edge mask.
    # Centre taps are excluded -- they are unmasked scalar multiplies in the kernel.
    cols = np.tile(np.arange(W, dtype=np.int64), H)      # column index of each flat pixel
    rws = np.repeat(np.arange(H, dtype=np.int64), W)     # row index of each flat pixel
    rows = []
    for dx in range(kw):
        if dx == pad_w:
            continue
        m = ((cols + dx - pad_w >= 0) & (cols + dx - pad_w < W)).astype(np.float32)
        rows.append(np.float32(wk_w[dx]) * m)
    for dy in range(kh):
        if dy == pad_h:
            continue
        m = ((rws + dy - pad_h >= 0) & (rws + dy - pad_h < H)).astype(np.float32)
        rows.append(np.float32(wk_h[dy]) * m)
    coef = jnp.asarray(np.stack(rows, axis=0))           # (kw+kh-2, HW) float32
    n_coef = int(coef.shape[0])

    # bf16 tap multiplies with f32 accumulation for bf16 inputs; f32 everywhere else.
    mul_dtype = jnp.bfloat16 if x.dtype == jnp.bfloat16 else jnp.float32
    # TODO(synk): keep the f32 multiply path on v5e even for bf16 inputs (no bf16 VPU there).

    itemsize = jnp.dtype(x.dtype).itemsize
    vmem_cap = _vmem_capacity_bytes()
    n_blk = _choose_plane_block(N, HW, itemsize, vmem_cap)
    grid = (pl.cdiv(N, n_blk),)
    vmem_limit = _vmem_limit_bytes(n_blk, HW, itemsize, n_coef, vmem_cap)

    # TODO(synk): for very large planes (multi-MiB H*W, e.g. 2048x2048 f32) add H-strip
    # tiling with a (kh-1)-row halo so the working set fits v7x's 64 MiB VMEM, and/or the
    # MXU banded-Toeplitz path to move the per-pixel MACs off the VPU on v6e/v7x.

    kernel = _make_blur_kernel(H, W, kh, kw, wk_h, wk_w, mul_dtype)

    out2 = pl.pallas_call(
        kernel,
        out_shape=jax.ShapeDtypeStruct((N, HW), x.dtype),
        grid_spec=pltpu.PrefetchScalarGridSpec(
            num_scalar_prefetch=0,
            grid=grid,
            in_specs=[
                # same block every step -> stays VMEM-resident, no per-step re-DMA
                pl.BlockSpec((n_coef, HW), lambda i: (0, 0)),
                pl.BlockSpec((n_blk, HW), lambda i: (i, 0)),
            ],
            out_specs=pl.BlockSpec((n_blk, HW), lambda i: (i, 0)),
        ),
        compiler_params=pltpu.CompilerParams(
            dimension_semantics=("parallel",),
            vmem_limit_bytes=vmem_limit,
        ),
    )(coef, x2)
    return out2.reshape(B, C, H, W)


def _reference_blur(x, kernel_size=(5, 5), sigma=(1.5, 1.5)):
    """Pure-JAX reference (depthwise conv2d, groups=C, zero padding)."""
    B, C, H, W = x.shape
    kh, kw = kernel_size
    w2d = jnp.asarray(get_gaussian_kernel2d(kernel_size, sigma), dtype=x.dtype)
    w = jnp.tile(w2d[None, None], (C, 1, 1, 1))              # (C,1,kh,kw)
    return jax.lax.conv_general_dilated(
        x, w,
        window_strides=(1, 1),
        padding=(((kh - 1) // 2, (kh - 1) // 2), ((kw - 1) // 2, (kw - 1) // 2)),
        dimension_numbers=("NCHW", "OIHW", "NCHW"),
        feature_group_count=C,
        precision=jax.lax.Precision.HIGHEST,
    )


if __name__ == "__main__":
    key = jax.random.PRNGKey(0)
    x = jax.random.normal(key, (2, 4, 16, 16), dtype=jnp.float32)

    out = gaussian_blur(x, kernel_size=(5, 5), sigma=(1.5, 1.5))
    out = jax.block_until_ready(out)

    ref = _reference_blur(x, kernel_size=(5, 5), sigma=(1.5, 1.5))
    assert out.shape == x.shape
    assert jnp.allclose(out, ref, atol=1e-5, rtol=1e-5), "mismatch vs reference"

    print("KERNEL_OK")
</pallas_src>

<mosaic_0001>
module attributes {stable_mosaic.version = 11 : i64} {
  func.func @blur_kernel(%arg0: i32, %arg1: memref<8x256xf32, #tpu.memory_space<vmem>>, %arg2: memref<8x256xf32, #tpu.memory_space<vmem>>, %arg3: memref<8x256xf32, #tpu.memory_space<vmem>>) attributes {dimension_semantics = [#tpu.dimension_semantics<parallel>], iteration_bounds = array<i64: 1>, scalar_prefetch = 0 : i64, scratch_operands = 0 : i64, tpu.core_type = #tpu.core_type<tc>, window_params = [{pipeline_mode = #tpu.pipeline_mode<synchronous>, transform_indices = @transform_0, window_bounds = array<i64: 8, 256>}, {transform_indices = @transform_1, window_bounds = array<i64: 8, 256>}, {transform_indices = @transform_2, window_bounds = array<i64: 8, 256>}]} {
    %c0 = arith.constant 0 : index
    %c0_0 = arith.constant 0 : index
    %0 = vector.load %arg2[%c0, %c0_0] : memref<8x256xf32, #tpu.memory_space<vmem>>, vector<8x256xf32>
    %cst = arith.constant 0.292081714 : f32
    %1 = vector.broadcast %cst : f32 to vector<8x256xf32>
    %2 = arith.mulf %0, %1 : vector<8x256xf32>
    %c2_i32 = arith.constant 2 : i32
    %3 = tpu.dynamic_rotate %0 by %c2_i32 dim 1 : vector<8x256xf32>, i32 -> vector<8x256xf32>
    %c0_1 = arith.constant 0 : index
    %c0_2 = arith.constant 0 : index
    %4 = vector.load %arg1[%c0_1, %c0_2] : memref<8x256xf32, #tpu.memory_space<vmem>>, vector<1x256xf32>
    %5 = vector.broadcast %4 : vector<1x256xf32> to vector<8x256xf32>
    %6 = arith.mulf %3, %5 : vector<8x256xf32>
    %7 = arith.addf %2, %6 : vector<8x256xf32>
    %c1_i32 = arith.constant 1 : i32
    %8 = tpu.dynamic_rotate %0 by %c1_i32 dim 1 : vector<8x256xf32>, i32 -> vector<8x256xf32>
    %c1 = arith.constant 1 : index
    %c0_3 = arith.constant 0 : index
    %9 = vector.load %arg1[%c1, %c0_3] : memref<8x256xf32, #tpu.memory_space<vmem>>, vector<1x256xf32>
    %10 = vector.broadcast %9 : vector<1x256xf32> to vector<8x256xf32>
    %11 = arith.mulf %8, %10 : vector<8x256xf32>
    %12 = arith.addf %7, %11 : vector<8x256xf32>
    %c255_i32 = arith.constant 255 : i32
    %13 = tpu.dynamic_rotate %0 by %c255_i32 dim 1 : vector<8x256xf32>, i32 -> vector<8x256xf32>
    %c2 = arith.constant 2 : index
    %c0_4 = arith.constant 0 : index
    %14 = vector.load %arg1[%c2, %c0_4] : memref<8x256xf32, #tpu.memory_space<vmem>>, vector<1x256xf32>
    %15 = vector.broadcast %14 : vector<1x256xf32> to vector<8x256xf32>
    %16 = arith.mulf %13, %15 : vector<8x256xf32>
    %17 = arith.addf %12, %16 : vector<8x256xf32>
    %c254_i32 = arith.constant 254 : i32
    %18 = tpu.dynamic_rotate %0 by %c254_i32 dim 1 : vector<8x256xf32>, i32 -> vector<8x256xf32>
    %c3 = arith.constant 3 : index
    %c0_5 = arith.constant 0 : index
    %19 = vector.load %arg1[%c3, %c0_5] : memref<8x256xf32, #tpu.memory_space<vmem>>, vector<1x256xf32>
    %20 = vector.broadcast %19 : vector<1x256xf32> to vector<8x256xf32>
    %21 = arith.mulf %18, %20 : vector<8x256xf32>
    %22 = arith.addf %17, %21 : vector<8x256xf32>
    %cst_6 = arith.constant 0.292081714 : f32
    %23 = vector.broadcast %cst_6 : f32 to vector<8x256xf32>
    %24 = arith.mulf %22, %23 : vector<8x256xf32>
    %c32_i32 = arith.constant 32 : i32
    %25 = tpu.dynamic_rotate %22 by %c32_i32 dim 1 : vector<8x256xf32>, i32 -> vector<8x256xf32>
    %c4 = arith.constant 4 : index
    %c0_7 = arith.constant 0 : index
    %26 = vector.load %arg1[%c4, %c0_7] : memref<8x256xf32, #tpu.memory_space<vmem>>, vector<1x256xf32>
    %27 = vector.broadcast %26 : vector<1x256xf32> to vector<8x256xf32>
    %28 = arith.mulf %25, %27 : vector<8x256xf32>
    %29 = arith.addf %24, %28 : vector<8x256xf32>
    %c16_i32 = arith.constant 16 : i32
    %30 = tpu.dynamic_rotate %22 by %c16_i32 dim 1 : vector<8x256xf32>, i32 -> vector<8x256xf32>
    %c5 = arith.constant 5 : index
    %c0_8 = arith.constant 0 : index
    %31 = vector.load %arg1[%c5, %c0_8] : memref<8x256xf32, #tpu.memory_space<vmem>>, vector<1x256xf32>
    %32 = vector.broadcast %31 : vector<1x256xf32> to vector<8x256xf32>
    %33 = arith.mulf %30, %32 : vector<8x256xf32>
    %34 = arith.addf %29, %33 : vector<8x256xf32>
    %c240_i32 = arith.constant 240 : i32
    %35 = tpu.dynamic_rotate %22 by %c240_i32 dim 1 : vector<8x256xf32>, i32 -> vector<8x256xf32>
    %c6 = arith.constant 6 : index
    %c0_9 = arith.constant 0 : index
    %36 = vector.load %arg1[%c6, %c0_9] : memref<8x256xf32, #tpu.memory_space<vmem>>, vector<1x256xf32>
    %37 = vector.broadcast %36 : vector<1x256xf32> to vector<8x256xf32>
    %38 = arith.mulf %35, %37 : vector<8x256xf32>
    %39 = arith.addf %34, %38 : vector<8x256xf32>
    %c224_i32 = arith.constant 224 : i32
    %40 = tpu.dynamic_rotate %22 by %c224_i32 dim 1 : vector<8x256xf32>, i32 -> vector<8x256xf32>
    %c7 = arith.constant 7 : index
    %c0_10 = arith.constant 0 : index
    %41 = vector.load %arg1[%c7, %c0_10] : memref<8x256xf32, #tpu.memory_space<vmem>>, vector<1x256xf32>
    %42 = vector.broadcast %41 : vector<1x256xf32> to vector<8x256xf32>
    %43 = arith.mulf %40, %42 : vector<8x256xf32>
    %44 = arith.addf %39, %43 : vector<8x256xf32>
    %c0_11 = arith.constant 0 : index
    %c0_12 = arith.constant 0 : index
    %45 = vector.load %arg3[%c0_11, %c0_12] : memref<8x256xf32, #tpu.memory_space<vmem>>, vector<8x256xf32>
    tpu.vector_store %arg3[%c0_11, %c0_12], %44 {strides = array<i32>} : memref<8x256xf32, #tpu.memory_space<vmem>>, vector<8x256xf32>,
    return
  }
  func.func @transform_0(%arg0: i32) -> (i32, i32) {
    %c0_i32 = arith.constant 0 : i32
    %c0_i32_0 = arith.constant 0 : i32
    %c0_i32_1 = arith.constant 0 : i32
    return %c0_i32, %c0_i32_0 : i32, i32
  }
  func.func @transform_1(%arg0: i32) -> (i32, i32) {
    %c0_i32 = arith.constant 0 : i32
    %c0_i32_0 = arith.constant 0 : i32
    return %arg0, %c0_i32 : i32, i32
  }
  func.func @transform_2(%arg0: i32) -> (i32, i32) {
    %c0_i32 = arith.constant 0 : i32
    %c0_i32_0 = arith.constant 0 : i32
    return %arg0, %c0_i32 : i32, i32
  }
}

</mosaic_0001>

<llo_original>
// kernel: tpu_custom_call.1
$region0: #{tpu_custom_call.1}
  #allocation0 [shape = 'u32[]', space=smem, size = 0x4, offset = 0x4, fixed_abs, tag = 'smem constant byte address 0x4 - core index']
  #allocation1 [shape = 'u32[72,128]{1,0:T(1,128)}', space=vmem, size = 0x9000, scoped, tag = 'internal scratch']
  %s0 = inlined_call_operand.hbm [shape: f32[8,256], index: 0, kind: input, shape index: {}]
  %s1 = inlined_call_operand.hbm [shape: f32[8,256], index: 1, kind: input, shape index: {}]
  %s2 = inlined_call_operand.hbm [shape: f32[8,256], index: 2, kind: output, shape index: {}]
  %s3 = sld [smem:[#allocation0]]
  $region26: #{tpu_custom_call.1} parent=0
    _
  %s5 = ssub.s32 1, %s3
  %s6 = scalar_select 0, %s5, %s3
  $region1: #{tpu_custom_call.1} parent=0
    #allocation2 [shape = 'u8[8192]{0}', space=vmem, size = 0x2000, scoped, tag = 'input window, operand 0, single buffered']
    #allocation3 [shape = 's32[1]{0}', space=sflag, size = 0x4, scoped, tag = 'scoped memory for tpu_custom_call.1']
    #allocation4 [shape = 's32[1]{0}', space=sflag, size = 0x4, scoped, tag = 'scoped memory for tpu_custom_call.1']
    #allocation5 [shape = 'u8[8192]{0}', space=vmem, size = 0x2000, scoped, tag = 'input window, operand 1, single buffered']
    #allocation6 [shape = 's32[1]{0}', space=sflag, size = 0x4, scoped, tag = 'scoped memory for tpu_custom_call.1']
    #allocation7 [shape = 'u8[8192]{0}', space=vmem, size = 0x2000, scoped, tag = 'output window, operand 0, single buffered']
    %7 = vsyncpa [#allocation3], 0
    %8 = vsyncpa [#allocation6], 0
    %9 = vsyncpa [#allocation4], 0
    // Predicated region
    $region2: #{tpu_custom_call.1} parent=1 // pred_check
      _
    $region3: #{tpu_custom_call.1} parent=1 // pred_check_branch
      %11 = sbr.rel (0) target = $region5
    $region4: #{tpu_custom_call.1} parent=1 // pred_region
      %13 = vsyncadd [#allocation3], 0
      %s15 = sshll.u32 %s0, 4
      %s16 = int_to_ptr.hbm [resolvable:$true] %s15
      %s17 = sshll.u32 [#allocation2], 4
      %s18 = int_to_ptr.vmem [resolvable:$true] %s17
      %20 = dma.hbm_to_vmem [thread:$0]  %s16, 256, %s18, [#allocation3]
    $region5: #{tpu_custom_call.1} parent=1 // pred_fallthru
      _
    // Predicated region
    $region6: #{tpu_custom_call.1} parent=1 // pred_check
      _
    $region7: #{tpu_custom_call.1} parent=1 // pred_check_branch
      %22 = sbr.rel (0) target = $region9
    $region8: #{tpu_custom_call.1} parent=1 // pred_region
      %24 = vsyncadd [#allocation6], 0
      %s26 = sshll.u32 %s1, 4
      %s27 = int_to_ptr.hbm [resolvable:$true] %s26
      %s28 = sshll.u32 [#allocation5], 4
      %s29 = int_to_ptr.vmem [resolvable:$true] %s28
      %31 = dma.hbm_to_vmem [thread:$0]  %s27, 256, %s29, [#allocation6]
    $region9: #{tpu_custom_call.1} parent=1 // pred_fallthru
      _
    // Predicated region
    $region10: #{tpu_custom_call.1} parent=1 // pred_check
      _
    $region11: #{tpu_custom_call.1} parent=1 // pred_check_branch
      %33 = sbr.rel (0) target = $region13
    $region12: #{tpu_custom_call.1} parent=1 // pred_region
      %35 = dma.done [#allocation3], 256
    $region13: #{tpu_custom_call.1} parent=1 // pred_fallthru
      _
    // Predicated region
    $region14: #{tpu_custom_call.1} parent=1 // pred_check
      _
    $region15: #{tpu_custom_call.1} parent=1 // pred_check_branch
      %37 = sbr.rel (0) target = $region17
    $region16: #{tpu_custom_call.1} parent=1 // pred_region
      %39 = dma.done [#allocation6], 256
    $region17: #{tpu_custom_call.1} parent=1 // pred_fallthru
      _
    %v40 = vld [vmem:[#allocation5] sm:$0xff]
    %v41 = vld [vmem:[#allocation5 + $0x8] sm:$0xff]
    %v42 = vmul.f32 %v40, 0.2920817
    %v43 = vmul.f32 %v41, 0.2920817
    %44 = vrot.lane.b32.xlu0 %v40, 2
    %v45 = vpop.permute.xlu0 %44
    %46 = vrot.lane.b32.xlu0 %v41, 2
    %v47 = vpop.permute.xlu0 %46
    %v48 = vlaneseq
    %v49 = vand.u32 %v48, 127
    %vm50 = vcmp.lt.s32.totalorder %v49, 2
    %v51 = vsel %vm50, %v45, %v47
    %v52 = vsel %vm50, %v47, %v45
    %v53 = vld [vmem:[#allocation2] ss:$8 sm:$0x3]
    %v55 = vperm.slane %v53, 0
    %v56 = vperm.slane %v53, 1
    %v59 = vmul.f32 %v52, %v55
    %v60 = vmul.f32 %v51, %v56
    %v61 = vadd.f32 %v42, %v59
    %v62 = vadd.f32 %v43, %v60
    %63 = vrot.lane.b32.xlu0 %v40, 1
    %v64 = vpop.permute.xlu0 %63
    %65 = vrot.lane.b32.xlu0 %v41, 1
    %v66 = vpop.permute.xlu0 %65
    %vm67 = vcmp.lt.s32.totalorder %v49, 1
    %v68 = vsel %vm67, %v64, %v66
    %v69 = vsel %vm67, %v66, %v64
    %s70 = scalar_lea.vmem [#allocation2], 1
    %v71 = vld [vmem:[%s70] ss:$8 sm:$0x3]
    %v73 = vperm.slane %v71, 0
    %v74 = vperm.slane %v71, 1
    %v77 = vmul.f32 %v69, %v73
    %v78 = vmul.f32 %v68, %v74
    %v79 = vadd.f32 %v61, %v77
    %v80 = vadd.f32 %v62, %v78
    %81 = vrot.lane.b32.xlu0 %v40, 127
    %v82 = vpop.permute.xlu0 %81
    %83 = vrot.lane.b32.xlu0 %v41, 127
    %v84 = vpop.permute.xlu0 %83
    %vm85 = vcmp.lt.s32.totalorder %v49, 127
    %v86 = vsel %vm85, %v82, %v84
    %v87 = vsel %vm85, %v84, %v82
    %s88 = scalar_lea.vmem [#allocation2], 2
    %v89 = vld [vmem:[%s88] ss:$8 sm:$0x3]
    %v91 = vperm.slane %v89, 0
    %v92 = vperm.slane %v89, 1
    %v95 = vmul.f32 %v86, %v91
    %v96 = vmul.f32 %v87, %v92
    %v97 = vadd.f32 %v79, %v95
    %v98 = vadd.f32 %v80, %v96
    %99 = vrot.lane.b32.xlu0 %v40, 126
    %v100 = vpop.permute.xlu0 %99
    %101 = vrot.lane.b32.xlu0 %v41, 126
    %v102 = vpop.permute.xlu0 %101
    %vm103 = vcmp.lt.s32.totalorder %v49, 126
    %v104 = vsel %vm103, %v100, %v102
    %v105 = vsel %vm103, %v102, %v100
    %s106 = scalar_lea.vmem [#allocation2], 3
    %v107 = vld [vmem:[%s106] ss:$8 sm:$0x3]
    %v109 = vperm.slane %v107, 0
    %v110 = vperm.slane %v107, 1
    %v113 = vmul.f32 %v104, %v109
    %v114 = vmul.f32 %v105, %v110
    %v115 = vadd.f32 %v97, %v113
    %v116 = vadd.f32 %v98, %v114
    %v117 = vmul.f32 %v115, 0.2920817
    %v118 = vmul.f32 %v116, 0.2920817
    %119 = vrot.lane.b32.xlu0 %v115, 32
    %v120 = vpop.permute.xlu0 %119
    %121 = vrot.lane.b32.xlu0 %v116, 32
    %v122 = vpop.permute.xlu0 %121
    %vm123 = vcmp.lt.s32.totalorder %v49, 32
    %v124 = vsel %vm123, %v120, %v122
    %v125 = vsel %vm123, %v122, %v120
    %s126 = scalar_lea.vmem [#allocation2], 4
    %v127 = vld [vmem:[%s126] ss:$8 sm:$0x3]
    %v129 = vperm.slane %v127, 0
    %v130 = vperm.slane %v127, 1
    %v133 = vmul.f32 %v125, %v129
    %v134 = vmul.f32 %v124, %v130
    %v135 = vadd.f32 %v117, %v133
    %v136 = vadd.f32 %v118, %v134
    %137 = vrot.lane.b32.xlu0 %v115, 16
    %v138 = vpop.permute.xlu0 %137
    %139 = vrot.lane.b32.xlu0 %v116, 16
    %v140 = vpop.permute.xlu0 %139
    %vm141 = vcmp.lt.s32.totalorder %v49, 16
    %v142 = vsel %vm141, %v138, %v140
    %v143 = vsel %vm141, %v140, %v138
    %s144 = scalar_lea.vmem [#allocation2], 5
    %v145 = vld [vmem:[%s144] ss:$8 sm:$0x3]
    %v147 = vperm.slane %v145, 0
    %v148 = vperm.slane %v145, 1
    %v151 = vmul.f32 %v143, %v147
    %v152 = vmul.f32 %v142, %v148
    %v153 = vadd.f32 %v135, %v151
    %v154 = vadd.f32 %v136, %v152
    %155 = vrot.lane.b32.xlu0 %v115, 112
    %v156 = vpop.permute.xlu0 %155
    %157 = vrot.lane.b32.xlu0 %v116, 112
    %v158 = vpop.permute.xlu0 %157
    %vm159 = vcmp.lt.s32.totalorder %v49, 112
    %v160 = vsel %vm159, %v156, %v158
    %v161 = vsel %vm159, %v158, %v156
    %s162 = scalar_lea.vmem [#allocation2], 6
    %v163 = vld [vmem:[%s162] ss:$8 sm:$0x3]
    %v165 = vperm.slane %v163, 0
    %v166 = vperm.slane %v163, 1
    %v169 = vmul.f32 %v160, %v165
    %v170 = vmul.f32 %v161, %v166
    %v171 = vadd.f32 %v153, %v169
    %v172 = vadd.f32 %v154, %v170
    %173 = vrot.lane.b32.xlu0 %v115, 96
    %v174 = vpop.permute.xlu0 %173
    %175 = vrot.lane.b32.xlu0 %v116, 96
    %v176 = vpop.permute.xlu0 %175
    %vm177 = vcmp.lt.s32.totalorder %v49, 96
    %v178 = vsel %vm177, %v174, %v176
    %v179 = vsel %vm177, %v176, %v174
    %s180 = scalar_lea.vmem [#allocation2], 7
    %v181 = vld [vmem:[%s180] ss:$8 sm:$0x3]
    %v183 = vperm.slane %v181, 0
    %v184 = vperm.slane %v181, 1
    %v187 = vmul.f32 %v178, %v183
    %v188 = vmul.f32 %v179, %v184
    %v189 = vadd.f32 %v171, %v187
    %v190 = vadd.f32 %v172, %v188
    %191 = vst [vmem:[#allocation7] sm:$0xff] %v189
    %192 = vst [vmem:[#allocation7 + $0x8] sm:$0xff] %v190
    // Predicated region
    $region18: #{tpu_custom_call.1} parent=1 // pred_check
      _
    $region19: #{tpu_custom_call.1} parent=1 // pred_check_branch
      %194 = sbr.rel (0) target = $region21
    $region20: #{tpu_custom_call.1} parent=1 // pred_region
      %196 = vsyncadd [#allocation4], 0
      %s198 = sshll.u32 [#allocation7], 4
      %s199 = int_to_ptr.vmem [resolvable:$true] %s198
      %s200 = sshll.u32 %s2, 4
      %s201 = int_to_ptr.hbm [resolvable:$true] %s200
      %203 = dma.vmem_to_hbm [thread:$0]  %s199, 256, %s201, [#allocation4]
    $region21: #{tpu_custom_call.1} parent=1 // pred_fallthru
      _
    // Predicated region
    $region22: #{tpu_custom_call.1} parent=1 // pred_check
      _
    $region23: #{tpu_custom_call.1} parent=1 // pred_check_branch
      %205 = sbr.rel (0) target = $region25
    $region24: #{tpu_custom_call.1} parent=1 // pred_region
      %207 = dma.done [#allocation4], 256
    $region25: #{tpu_custom_call.1} parent=1 // pred_fallthru
      _
    %208 = vsyncpa [#allocation3], 1
    %209 = vsyncpa [#allocation6], 1
    %210 = vsyncpa [#allocation4], 1

</llo_original>
